<compile_context>
chip_gen: v7x
topology: tpu7x:2x2x1
jax: 0.10.0
libtpu: 0.0.40
codegen_flags: <defaults>
</compile_context>

<pallas_src>
import jax
import jax.numpy as jnp
from jax.experimental import pallas as pl
from jax.experimental.pallas import tpu as pltpu


def _round_up(x, m):
    return (x + m - 1) // m * m


def _patch_embed_kernel(x_ref, w_ref, b_ref, o_ref):
    # x_ref: (TM, Kp) bf16, w_ref: (Kp, TN) bf16, b_ref: (1, TN) f32,
    # o_ref: (TM, TN) f32.  Single long-K MXU matmul with f32 accumulation.
    acc = jnp.dot(x_ref[...], w_ref[...], preferred_element_type=jnp.float32)
    o_ref[...] = (acc + b_ref[...]).astype(o_ref.dtype)


def patch_embed_matmul(patches, weight_ke, bias_e):
    """patches: (M, K) f32, weight_ke: (K, E) f32, bias_e: (E,) f32 -> (M, E) f32."""
    M, K = patches.shape
    _, E = weight_ke.shape

    # --- alignment / tiling ---
    Kp = _round_up(K, 128)              # lane-aligned K (zero-pad is exact)
    Ep = _round_up(E, 128)              # lane-dense output
    if Ep <= 1024:
        TN = Ep                         # single E tile (weight fully resident)
    else:
        TN = 512
        Ep = _round_up(Ep, TN)
    M8 = _round_up(M, 8)                # sublane alignment
    TM = min(512, M8)                   # ~85%-of-roofline tile size regime
    Mp = _round_up(M, TM)

    # bf16 inputs for the MXU; accumulation stays f32 in-kernel.
    x = jnp.zeros((Mp, Kp), jnp.bfloat16).at[:M, :K].set(patches.astype(jnp.bfloat16))
    w = jnp.zeros((Kp, Ep), jnp.bfloat16).at[:K, :E].set(weight_ke.astype(jnp.bfloat16))
    b = jnp.zeros((1, Ep), jnp.float32).at[0, :E].set(bias_e.astype(jnp.float32))

    grid = (Mp // TM, Ep // TN)
    cost = pl.CostEstimate(
        flops=2 * M * K * E,
        transcendentals=0,
        bytes_accessed=M * K * 2 + K * E * 2 + M * E * 4 + E * 4,
    )

    out = pl.pallas_call(
        _patch_embed_kernel,
        out_shape=jax.ShapeDtypeStruct((Mp, Ep), jnp.float32),
        grid_spec=pltpu.PrefetchScalarGridSpec(
            num_scalar_prefetch=0,
            grid=grid,
            in_specs=[
                pl.BlockSpec((TM, Kp), lambda i, j: (i, 0)),   # LHS tile per M block
                pl.BlockSpec((Kp, TN), lambda i, j: (0, j)),   # weight resident over M
                pl.BlockSpec((1, TN), lambda i, j: (0, j)),    # bias resident over M
            ],
            out_specs=pl.BlockSpec((TM, TN), lambda i, j: (i, j)),
        ),
        compiler_params=pltpu.CompilerParams(
            dimension_semantics=("parallel", "parallel"),  # megacore on v7x
            vmem_limit_bytes=48 << 20,                     # sized for v7x's 64 MiB
        ),
        cost_estimate=cost,
    )(x, w, b)
    return out[:M, :E]


class EmbedLayerWithNonePallas:
    def __init__(self, n_channels, embed_dim, image_size, patch_size, key):
        self.n_channels = n_channels
        self.embed_dim = embed_dim
        self.image_size = image_size
        self.patch_size = patch_size
        k_w, k_cls = jax.random.split(key)
        # trunc_normal_(mean=0, std=0.02) == truncated std normal on [-2, 2] * 0.02
        self.conv_weight = (
            jax.random.truncated_normal(
                k_w, -2.0, 2.0,
                (embed_dim, n_channels, patch_size, patch_size), jnp.float32)
            * 0.02)
        self.conv_bias = jnp.zeros((embed_dim,), jnp.float32)
        self.cls_token = (
            jax.random.truncated_normal(k_cls, -2.0, 2.0,
                                        (1, 1, embed_dim), jnp.float32) * 0.02)

    def __call__(self, x):
        # x: (B, C, H, W) NCHW, same as the PyTorch module.
        B, C, H, W = x.shape
        P = self.patch_size
        E = self.embed_dim
        Hp, Wp = H // P, W // P

        # Patchify: (B, C, Hp, P, Wp, P) -> (B, Hp, Wp, C, P, P) -> (B*Hp*Wp, C*P*P)
        patches = x.reshape(B, C, Hp, P, Wp, P)
        patches = patches.transpose(0, 2, 4, 1, 3, 5)
        patches = patches.reshape(B * Hp * Wp, C * P * P).astype(jnp.float32)

        # Conv weight (E, C, P, P) -> (K, E) so patches @ w == conv output.
        w_ke = self.conv_weight.reshape(E, C * P * P).T

        # Hot path: tiled Pallas matmul + bias on the MXU.
        emb = patch_embed_matmul(patches, w_ke, self.conv_bias)  # (B*N, E)
        emb = emb.reshape(B, Hp * Wp, E)                         # == reshape + permute(0,2,1)

        # Prepend cls token (repeat_interleave over batch, then concat on seq axis).
        cls = jnp.broadcast_to(self.cls_token, (B, 1, E))
        out = jnp.concatenate([cls, emb], axis=1)                # (B, N+1, E)
        # dropout(p=0.0) is identity.
        return out


def _reference(module, x):
    """Pure-JAX f32 reference using lax.conv_general_dilated for verification."""
    B = x.shape[0]
    y = jax.lax.conv_general_dilated(
        x.astype(jnp.float32), module.conv_weight,
        window_strides=(module.patch_size, module.patch_size),
        padding="VALID",
        dimension_numbers=("NCHW", "OIHW", "NCHW"))
    y = y + module.conv_bias[None, :, None, None]
    y = y.reshape(B, module.embed_dim, -1).transpose(0, 2, 1)
    cls = jnp.broadcast_to(module.cls_token, (B, 1, module.embed_dim))
    return jnp.concatenate([cls, y], axis=1)


if __name__ == "__main__":
    key = jax.random.PRNGKey(0)
    k_param, k_x = jax.random.split(key)

    B, C, IMG, PATCH, EMBED = 2, 4, 16, 4, 32
    module = EmbedLayerWithNonePallas(C, EMBED, IMG, PATCH, k_param)

    x = jax.random.normal(k_x, (B, C, IMG, IMG), jnp.float32)

    out = module(x)
    out = jax.block_until_ready(out)

    ref = jax.block_until_ready(_reference(module, x))
    assert out.shape == (B, (IMG // PATCH) ** 2 + 1, EMBED), out.shape
    # bf16 LHS/RHS with f32 accumulation -> relaxed tolerance vs the f32 conv ref.
    assert jnp.allclose(out, ref, atol=2e-2, rtol=2e-2), "mismatch vs reference"

    print("KERNEL_OK")
</pallas_src>

<mosaic_0001>
module attributes {stable_mosaic.version = 11 : i64} {
  func.func @_patch_embed_kernel(%arg0: i32, %arg1: i32, %arg2: memref<32x128xbf16, #tpu.memory_space<vmem>>, %arg3: memref<128x128xbf16, #tpu.memory_space<vmem>>, %arg4: memref<1x128xf32, #tpu.memory_space<vmem>>, %arg5: memref<32x128xf32, #tpu.memory_space<vmem>>) attributes {dimension_semantics = [#tpu.dimension_semantics<parallel>, #tpu.dimension_semantics<parallel>], iteration_bounds = array<i64: 1, 1>, scalar_prefetch = 0 : i64, scratch_operands = 0 : i64, tpu.core_type = #tpu.core_type<tc>, window_params = [{transform_indices = @transform_0, window_bounds = array<i64: 32, 128>}, {transform_indices = @transform_1, window_bounds = array<i64: 128, 128>}, {transform_indices = @transform_2, window_bounds = array<i64: 1, 128>}, {transform_indices = @transform_3, window_bounds = array<i64: 32, 128>}]} {
    %c0 = arith.constant 0 : index
    %c0_0 = arith.constant 0 : index
    %0 = vector.load %arg2[%c0, %c0_0] : memref<32x128xbf16, #tpu.memory_space<vmem>>, vector<32x128xbf16>
    %c0_1 = arith.constant 0 : index
    %c0_2 = arith.constant 0 : index
    %1 = vector.load %arg3[%c0_1, %c0_2] : memref<128x128xbf16, #tpu.memory_space<vmem>>, vector<128x128xbf16>
    %cst = arith.constant dense<0.000000e+00> : vector<32x128xf32>
    %2 = tpu.matmul %0, %1, %cst {dimension_numbers = #tpu.dot_dimension_numbers<[1], [0], [0], [1], [0, 0, 1, 1], [], []>} : vector<32x128xbf16>, vector<128x128xbf16>, vector<32x128xf32> -> vector<32x128xf32>
    %c0_3 = arith.constant 0 : index
    %c0_4 = arith.constant 0 : index
    %3 = vector.load %arg4[%c0_3, %c0_4] : memref<1x128xf32, #tpu.memory_space<vmem>>, vector<1x128xf32>
    %4 = vector.broadcast %3 : vector<1x128xf32> to vector<32x128xf32>
    %5 = arith.addf %2, %4 : vector<32x128xf32>
    %c0_5 = arith.constant 0 : index
    %c0_6 = arith.constant 0 : index
    %6 = vector.load %arg5[%c0_5, %c0_6] : memref<32x128xf32, #tpu.memory_space<vmem>>, vector<32x128xf32>
    tpu.vector_store %arg5[%c0_5, %c0_6], %5 {strides = array<i32>} : memref<32x128xf32, #tpu.memory_space<vmem>>, vector<32x128xf32>,
    return
  }
  func.func @transform_0(%arg0: i32, %arg1: i32) -> (i32, i32) {
    %c0_i32 = arith.constant 0 : i32
    %c0_i32_0 = arith.constant 0 : i32
    return %arg0, %c0_i32 : i32, i32
  }
  func.func @transform_1(%arg0: i32, %arg1: i32) -> (i32, i32) {
    %c0_i32 = arith.constant 0 : i32
    %c0_i32_0 = arith.constant 0 : i32
    return %c0_i32, %arg1 : i32, i32
  }
  func.func @transform_2(%arg0: i32, %arg1: i32) -> (i32, i32) {
    %c0_i32 = arith.constant 0 : i32
    %c0_i32_0 = arith.constant 0 : i32
    return %c0_i32, %arg1 : i32, i32
  }
  func.func @transform_3(%arg0: i32, %arg1: i32) -> (i32, i32) {
    %c0_i32 = arith.constant 0 : i32
    return %arg0, %arg1 : i32, i32
  }
}

</mosaic_0001>

<llo_original>
// kernel: tpu_custom_call.1
$region0: #{tpu_custom_call.1}
  #allocation0 [shape = 'u32[]', space=smem, size = 0x4, offset = 0x4, fixed_abs, tag = 'smem constant byte address 0x4 - core index']
  #allocation1 [shape = 'u32[144,128]{1,0:T(1,128)}', space=vmem, size = 0x12000, scoped, tag = 'internal scratch']
  %s0 = inlined_call_operand.hbm [shape: bf16[32,128], index: 0, kind: input, shape index: {}]
  %s1 = inlined_call_operand.hbm [shape: bf16[128,128], index: 1, kind: input, shape index: {}]
  %s2 = inlined_call_operand.vmem [shape: f32[1,128], index: 2, kind: input, shape index: {}]
  %s3 = inlined_call_operand.hbm [shape: f32[32,128], index: 3, kind: output, shape index: {}]
  %s4 = sld [smem:[#allocation0]]
  $region30: #{tpu_custom_call.1} parent=0
    _
  %s6 = ssub.s32 1, %s4
  %s7 = scalar_select 0, %s6, %s4
  $region1: #{tpu_custom_call.1} parent=0
    #allocation2 [shape = 'u8[8192]{0}', space=vmem, size = 0x2000, scoped, tag = 'input window, operand 0, single buffered']
    #allocation3 [shape = 's32[1]{0}', space=sflag, size = 0x4, scoped, tag = 'scoped memory for tpu_custom_call.1']
    #allocation4 [shape = 's32[1]{0}', space=sflag, size = 0x4, scoped, tag = 'scoped memory for tpu_custom_call.1']
    #allocation5 [shape = 'u8[32768]{0}', space=vmem, size = 0x8000, scoped, tag = 'input window, operand 1, single buffered']
    #allocation6 [shape = 's32[1]{0}', space=sflag, size = 0x4, scoped, tag = 'scoped memory for tpu_custom_call.1']
    #allocation7 [shape = 'u8[16384]{0}', space=vmem, size = 0x4000, scoped, tag = 'output window, operand 0, single buffered']
    %8 = vsyncpa [#allocation3], 0
    %9 = vsyncpa [#allocation6], 0
    %10 = vsyncpa [#allocation4], 0
    // Predicated region
    $region2: #{tpu_custom_call.1} parent=1 // pred_check
      _
    $region3: #{tpu_custom_call.1} parent=1 // pred_check_branch
      %12 = sbr.rel (0) target = $region5
    $region4: #{tpu_custom_call.1} parent=1 // pred_region
      %s14 = ssub.s32 256, 256
      %15 = vsyncadd [#allocation3], %s14
      %s16 = sshll.u32 [#allocation2], 4
      %s17 = int_to_ptr.vmem [resolvable:$true] %s16
      %22 = dma.hbm_to_vmem [thread:$0]  %s0, 256, %s17, [#allocation3], 64, 64, 4
    $region5: #{tpu_custom_call.1} parent=1 // pred_fallthru
      _
    // Predicated region
    $region6: #{tpu_custom_call.1} parent=1 // pred_check
      _
    $region7: #{tpu_custom_call.1} parent=1 // pred_check_branch
      %24 = sbr.rel (0) target = $region9
    $region8: #{tpu_custom_call.1} parent=1 // pred_region
      %s26 = ssub.s32 1024, 1024
      %27 = vsyncadd [#allocation6], %s26
      %s28 = sshll.u32 [#allocation5], 4
      %s29 = int_to_ptr.vmem [resolvable:$true] %s28
      %34 = dma.hbm_to_vmem [thread:$0]  %s1, 1024, %s29, [#allocation6], 64, 64, 4
    $region9: #{tpu_custom_call.1} parent=1 // pred_fallthru
      _
    // Predicated region
    $region10: #{tpu_custom_call.1} parent=1 // pred_check
      _
    $region11: #{tpu_custom_call.1} parent=1 // pred_check_branch
      %36 = sbr.rel (0) target = $region13
    $region12: #{tpu_custom_call.1} parent=1 // pred_region
      _
    $region13: #{tpu_custom_call.1} parent=1 // pred_fallthru
      _
    // Predicated region
    $region14: #{tpu_custom_call.1} parent=1 // pred_check
      _
    $region15: #{tpu_custom_call.1} parent=1 // pred_check_branch
      %38 = sbr.rel (0) target = $region17
    $region16: #{tpu_custom_call.1} parent=1 // pred_region
      %39 = dma.done [#allocation3], 256
    $region17: #{tpu_custom_call.1} parent=1 // pred_fallthru
      _
    // Predicated region
    $region18: #{tpu_custom_call.1} parent=1 // pred_check
      _
    $region19: #{tpu_custom_call.1} parent=1 // pred_check_branch
      %41 = sbr.rel (0) target = $region21
    $region20: #{tpu_custom_call.1} parent=1 // pred_region
      %42 = dma.done [#allocation6], 1024
    $region21: #{tpu_custom_call.1} parent=1 // pred_fallthru
      _
    %v44 = vld [vmem:[#allocation2] sm:$0xf]
    %v45 = vld [vmem:[#allocation2 + $0x4] sm:$0xf]
    %v46 = vld [vmem:[#allocation2 + $0x8] sm:$0xf]
    %v47 = vld [vmem:[#allocation2 + $0xc] sm:$0xf]
    %v48 = vld [vmem:[#allocation5] sm:$0xf]
    %v49 = vld [vmem:[#allocation5 + $0x4] sm:$0xf]
    %v50 = vld [vmem:[#allocation5 + $0x8] sm:$0xf]
    %v51 = vld [vmem:[#allocation5 + $0xc] sm:$0xf]
    %v52 = vld [vmem:[#allocation5 + $0x10] sm:$0xf]
    %v53 = vld [vmem:[#allocation5 + $0x14] sm:$0xf]
    %v54 = vld [vmem:[#allocation5 + $0x18] sm:$0xf]
    %v55 = vld [vmem:[#allocation5 + $0x1c] sm:$0xf]
    %v56 = vld [vmem:[#allocation5 + $0x20] sm:$0xf]
    %v57 = vld [vmem:[#allocation5 + $0x24] sm:$0xf]
    %v58 = vld [vmem:[#allocation5 + $0x28] sm:$0xf]
    %v59 = vld [vmem:[#allocation5 + $0x2c] sm:$0xf]
    %v60 = vld [vmem:[#allocation5 + $0x30] sm:$0xf]
    %v61 = vld [vmem:[#allocation5 + $0x34] sm:$0xf]
    %v62 = vld [vmem:[#allocation5 + $0x38] sm:$0xf]
    %v63 = vld [vmem:[#allocation5 + $0x3c] sm:$0xf]
    %v64 = vld [vmem:[%s2] sm:$0x1]
    %v66 = vlaneseq
    %v67 = vshrl.u32 %v66, 7
    %v68 = vsub.s32 0, %v67
    %v69 = vrot.slane %v64, %v68
    %v75 = vunpack.c.l.b16 %v44
    %v76 = vunpack.c.l.b16 %v45
    %v77 = vunpack.c.l.b16 %v46
    %v78 = vunpack.c.l.b16 %v47
    %v79 = vpack.c.b16 %v76, %v75
    %v80 = vpack.c.b16 %v78, %v77
    %v99 = vunpack.c.l.b16 %v48
    %v100 = vunpack.c.l.b16 %v49
    %v101 = vunpack.c.l.b16 %v50
    %v102 = vunpack.c.l.b16 %v51
    %v103 = vunpack.c.l.b16 %v52
    %v104 = vunpack.c.l.b16 %v53
    %v105 = vunpack.c.l.b16 %v54
    %v106 = vunpack.c.l.b16 %v55
    %v107 = vunpack.c.l.b16 %v56
    %v108 = vunpack.c.l.b16 %v57
    %v109 = vunpack.c.l.b16 %v58
    %v110 = vunpack.c.l.b16 %v59
    %v111 = vunpack.c.l.b16 %v60
    %v112 = vunpack.c.l.b16 %v61
    %v113 = vunpack.c.l.b16 %v62
    %v114 = vunpack.c.l.b16 %v63
    %v115 = vpack.c.b16 %v100, %v99
    %v116 = vpack.c.b16 %v102, %v101
    %v117 = vpack.c.b16 %v104, %v103
    %v118 = vpack.c.b16 %v106, %v105
    %v119 = vpack.c.b16 %v108, %v107
    %v120 = vpack.c.b16 %v110, %v109
    %v121 = vpack.c.b16 %v112, %v111
    %v122 = vpack.c.b16 %v114, %v113
    %131 = vmatprep.subr.bf16.mxu0 0
    %132 = vmatpush1.bf16.msra.mxu0 %v115
    %133 = vmatprep.subr.bf16.mxu0 0
    %134 = vmatpush1.bf16.msra.mxu0 %v116
    %135 = vmatprep.subr.bf16.mxu0 0
    %136 = vmatpush1.bf16.msra.mxu0 %v117
    %137 = vmatprep.subr.bf16.mxu0 0
    %138 = vmatpush1.bf16.msra.mxu0 %v118
    %139 = vmatprep.subr.bf16.mxu0 0
    %140 = vmatpush1.bf16.msra.mxu0 %v119
    %141 = vmatprep.subr.bf16.mxu0 0
    %142 = vmatpush1.bf16.msra.mxu0 %v120
    %143 = vmatprep.subr.bf16.mxu0 0
    %144 = vmatpush1.bf16.msra.mxu0 %v121
    %145 = vmatprep.subr.bf16.mxu0 0
    %146 = vmatpush1.bf16.msra.mxu0 %v122
    %147 = vmatprep.subr.bf16.mxu0 0
    %148 = vmatpush1.bf16.msra.mxu0 0
    %149 = vmatprep.subr.bf16.mxu0 0
    %150 = vmatpush1.bf16.msra.mxu0 0
    %151 = vmatprep.subr.bf16.mxu0 0
    %152 = vmatpush1.bf16.msra.mxu0 0
    %153 = vmatprep.subr.bf16.mxu0 0
    %154 = vmatpush1.bf16.msra.mxu0 0
    %155 = vmatprep.subr.bf16.mxu0 0
    %156 = vmatpush1.bf16.msra.mxu0 0
    %157 = vmatprep.subr.bf16.mxu0 0
    %158 = vmatpush1.bf16.msra.mxu0 0
    %159 = vmatprep.subr.bf16.mxu0 0
    %160 = vmatpush1.bf16.msra.mxu0 0
    %161 = vmatprep.subr.bf16.mxu0 0
    %162 = vmatpush1.bf16.msra.mxu0 0
    %163 = vmatprep.mubr.bf16.mxu0 0
    %164 = vmatmul.mubr.bf16.gmra.mrb[0].mxu0 %v79
    %v165 = vpop.f32.mrb[0].mxu0
    %v166 = vadd.f32 %v69, %v165
    %v167 = vpop.f32.mrb[0].mxu0
    %v168 = vpop.f32.mrb[0].mxu0
    %v169 = vadd.f32 %v69, %v168
    %v170 = vpop.f32.mrb[0].mxu0
    %171 = vmatprep.mubr.bf16.mxu0 0
    %172 = vmatmul.mubr.bf16.gmra.mrb[0].mxu0 %v80
    %v173 = vpop.f32.mrb[0].mxu0
    %v174 = vadd.f32 %v69, %v173
    %v175 = vpop.f32.mrb[0].mxu0
    %v176 = vpop.f32.mrb[0].mxu0
    %v177 = vadd.f32 %v69, %v176
    %v178 = vpop.f32.mrb[0].mxu0
    %179 = vdwg.mxu0
    %180 = vst [vmem:[#allocation7] sm:$0xff] %v166
    %181 = vst [vmem:[#allocation7 + $0x8] sm:$0xff] %v169
    %182 = vst [vmem:[#allocation7 + $0x10] sm:$0xff] %v174
    %183 = vst [vmem:[#allocation7 + $0x18] sm:$0xff] %v177
    // Predicated region
    $region22: #{tpu_custom_call.1} parent=1 // pred_check
      _
    $region23: #{tpu_custom_call.1} parent=1 // pred_check_branch
      %185 = sbr.rel (0) target = $region25
    $region24: #{tpu_custom_call.1} parent=1 // pred_region
      %s187 = ssub.s32 512, 512
      %188 = vsyncadd [#allocation4], %s187
      %s189 = sshll.u32 [#allocation7], 4
      %s190 = int_to_ptr.vmem [resolvable:$true] %s189
      %195 = dma.vmem_to_hbm [thread:$0]  %s190, 512, %s3, [#allocation4], 128, 128, 8
    $region25: #{tpu_custom_call.1} parent=1 // pred_fallthru
      _
    // Predicated region
    $region26: #{tpu_custom_call.1} parent=1 // pred_check
      _
    $region27: #{tpu_custom_call.1} parent=1 // pred_check_branch
      %197 = sbr.rel (0) target = $region29
    $region28: #{tpu_custom_call.1} parent=1 // pred_region
      %198 = dma.done [#allocation4], 512
    $region29: #{tpu_custom_call.1} parent=1 // pred_fallthru
      _
    %199 = vsyncpa [#allocation3], 1
    %200 = vsyncpa [#allocation6], 1
    %201 = vsyncpa [#allocation4], 1

</llo_original>
